<compile_context>
chip_gen: v5e
topology: v5e:2x2
jax: 0.10.0
libtpu: 0.0.40
codegen_flags: <defaults>
</compile_context>

<pallas_src>
import functools

import jax
import jax.numpy as jnp
from jax.experimental import pallas as pl
from jax.experimental.pallas import tpu as pltpu


def _cdiv(a, b):
    return (a + b - 1) // b


def _round_up(x, m):
    return _cdiv(x, m) * m


def _lstm_cell_kernel(h_ref, z_ref, c_ref, m_ref, n_ref, mask_ref,
                      w_ref, r_ref, b_ref,
                      c_out_ref, m_out_ref, h_out_ref, n_out_ref, *, dff):
    """One fused-gate sLSTM cell step on a (bm, ...) row tile."""
    # Cast MXU operands to bf16 in-kernel (no extra HBM pass in the wrapper;
    # a no-op if the caller already keeps h/z in bf16).
    h = h_ref[...].astype(jnp.bfloat16)                 # (bm, dff)
    z = z_ref[...].astype(jnp.bfloat16)                 # (bm, d_model)

    # Two accumulating MXU pushes (W over h, R over z); f32 accumulator.
    acc = jnp.dot(h, w_ref[...], preferred_element_type=jnp.float32)
    acc = acc + jnp.dot(z, r_ref[...], preferred_element_type=jnp.float32)
    acc = acc + b_ref[...]                              # (bm, 4*dff) f32

    i_tilde = acc[:, 0 * dff:1 * dff]
    f_tilde = acc[:, 1 * dff:2 * dff]
    o_tilde = acc[:, 2 * dff:3 * dff]
    z_tilde = acc[:, 3 * dff:4 * dff]

    m_prev = m_ref[...]
    c_prev = c_ref[...]
    n_prev = n_ref[...]
    mask = mask_ref[...] > 0.0                          # (bm, 1), broadcasts

    m_t = jnp.maximum(f_tilde + m_prev, i_tilde)
    i_t = jnp.exp(i_tilde - m_t)
    f_t = jnp.exp(f_tilde + m_prev - m_t)
    o_t = jax.nn.sigmoid(o_tilde)
    n_t = f_t * n_prev + i_t
    z_t = jnp.tanh(z_tilde)

    # Mask blend applies to c/h only; m_t and n_t are deliberately unblended
    # (matches the reference module).
    c_t = jnp.where(mask, c_prev * f_t + z_t * i_t, c_prev)
    # 1/(n+eps) runs on the otherwise-idle EUP slot.
    h_new = o_t * (c_t * pl.reciprocal(n_t + 1e-8, approx=True))

    c_out_ref[...] = c_t
    m_out_ref[...] = m_t
    n_out_ref[...] = n_t
    # bf16 output; both select branches are the same bf16 precision as the
    # value that feeds next step's matmul.
    h_out_ref[...] = jnp.where(mask, h_new.astype(h_out_ref.dtype), h)


@functools.partial(jax.jit,
                   static_argnames=("patch_size", "d_model", "dff", "block_m"))
def custom_lstm_cell(z_input, c_prev, m_prev, h_prev, n_prev, mask,
                     fused_params, *, patch_size, d_model, dff, block_m=None):
    """One step of the custom LSTM. All heavy compute happens in the kernel."""
    w_cat, r_cat, b_cat = fused_params   # (dff,4dff) bf16, (d_model,4dff) bf16, (1,4dff) f32

    # --- glue: flatten to (rows, features), matching the torch .view calls ---
    # Reshapes of leading dims are metadata-only; no dtype casts of h/z here.
    z2 = z_input.reshape(-1, d_model)
    h2 = h_prev.reshape(-1, dff)
    c2 = c_prev.reshape(-1, dff).astype(jnp.float32)
    n2 = n_prev.reshape(-1, dff).astype(jnp.float32)
    m2 = m_prev.reshape(-1, dff).astype(jnp.float32)
    mask2 = mask.reshape(-1, 1).astype(jnp.float32)

    M = h2.shape[0]                       # batch * patch_size

    # Per-generation VMEM budget (v7x: 64 MiB/TC, v5e/v6e: 128 MiB).
    try:
        vmem_cap = pltpu.get_tpu_info().vmem_capacity_bytes
    except Exception:                      # emulator / older jax fallback
        vmem_cap = 64 * 1024 * 1024
    vmem_limit = int(vmem_cap) * 3 // 4    # headroom for Mosaic internal scratch

    if block_m is None:
        block_m = 256 if vmem_cap <= 64 * 1024 * 1024 else 512

    # Row tile: multiple of 16 (bf16 sublane packing).  No host-side padding;
    # Pallas masks the partial last tile.
    bm = min(block_m, _round_up(M, 16))
    if M >= 32 and _cdiv(M, bm) < 2:
        # Give v7x's two TensorCores at least one tile each when M allows it.
        bm = _round_up(_cdiv(M, 2), 16)
    grid = (_cdiv(M, bm),)

    row_spec = lambda cols: pl.BlockSpec((bm, cols), lambda i: (i, 0))
    # Whole-array VMEM residency: copied in once, outside the row pipeline
    # (single copy in VMEM, shared by all row tiles).
    vmem_resident = pl.BlockSpec(memory_space=pltpu.MemorySpace.VMEM)

    out_shapes = (
        jax.ShapeDtypeStruct((M, dff), jnp.float32),    # c_t
        jax.ShapeDtypeStruct((M, dff), jnp.float32),    # m_t
        jax.ShapeDtypeStruct((M, dff), jnp.bfloat16),   # h_t (feeds next MXU)
        jax.ShapeDtypeStruct((M, dff), jnp.float32),    # n_t
    )

    c_t, m_t, h_t, n_t = pl.pallas_call(
        functools.partial(_lstm_cell_kernel, dff=dff),
        grid=grid,
        in_specs=[
            row_spec(dff),        # h
            row_spec(d_model),    # z
            row_spec(dff),        # c_prev
            row_spec(dff),        # m_prev
            row_spec(dff),        # n_prev
            row_spec(1),          # mask
            vmem_resident,        # W_cat  (dff, 4*dff)      bf16
            vmem_resident,        # R_cat  (d_model, 4*dff)  bf16
            vmem_resident,        # bias   (1, 4*dff)        f32
        ],
        out_specs=[row_spec(dff)] * 4,
        out_shape=out_shapes,
        compiler_params=pltpu.CompilerParams(
            dimension_semantics=("parallel",),
            vmem_limit_bytes=vmem_limit,
        ),
    )(h2, z2, c2, m2, n2, mask2, w_cat, r_cat, b_cat)

    B = M // patch_size
    shp = (B, patch_size, dff)
    return (c_t.reshape(shp), m_t.reshape(shp),
            h_t.reshape(shp), n_t.reshape(shp))


def init_params(key, d_model, dff):
    """Deterministic init mimicking nn.Linear defaults (uniform +/- 1/sqrt(fan_in)).

    Weights are pre-transposed to (in, out); biases are combined per gate
    (w*.bias + r*.bias) as (1, dff) arrays.
    """
    keys = jax.random.split(key, 16)
    k = iter(keys)

    def lin(kk, fan_in, fan_out):
        bound = 1.0 / jnp.sqrt(fan_in)
        w = jax.random.uniform(next(kk), (fan_in, fan_out), jnp.float32,
                               -bound, bound)
        b = jax.random.uniform(next(kk), (fan_out,), jnp.float32, -bound, bound)
        return w, b

    wi, bwi = lin(k, dff, dff)
    wf, bwf = lin(k, dff, dff)
    wo, bwo = lin(k, dff, dff)
    wz, bwz = lin(k, dff, dff)
    ri, bri = lin(k, d_model, dff)
    rf, brf = lin(k, d_model, dff)
    ro, bro = lin(k, d_model, dff)
    rz, brz = lin(k, d_model, dff)

    bi = (bwi + bri).reshape(1, dff)
    bf = (bwf + brf).reshape(1, dff)
    bo = (bwo + bro).reshape(1, dff)
    bz = (bwz + brz).reshape(1, dff)
    return (wi, wf, wo, wz, ri, rf, ro, rz, bi, bf, bo, bz)


def fuse_params(params, compute_dtype=jnp.bfloat16):
    """Fuse the 8 gate projections into W_cat (dff,4dff), R_cat (d_model,4dff),
    b_cat (1,4dff). Column order [i | f | o | z]. Done once, outside the hot path."""
    (wi, wf, wo, wz, ri, rf, ro, rz, bi, bf, bo, bz) = params
    w_cat = jnp.concatenate([wi, wf, wo, wz], axis=1).astype(compute_dtype)
    r_cat = jnp.concatenate([ri, rf, ro, rz], axis=1).astype(compute_dtype)
    b_cat = jnp.concatenate([bi, bf, bo, bz], axis=1).astype(jnp.float32)
    return w_cat, r_cat, b_cat


def reference_jax(z_input, c_prev, m_prev, h_prev, n_prev, mask, params,
                  patch_size, d_model, dff):
    """Plain-JAX f32 reference matching the PyTorch forward semantics."""
    (wi, wf, wo, wz, ri, rf, ro, rz, bi, bf, bo, bz) = params
    z = z_input.reshape(-1, patch_size, d_model)
    c = c_prev.reshape(-1, patch_size, dff)
    h = h_prev.reshape(-1, patch_size, dff)
    n = n_prev.reshape(-1, patch_size, dff)
    mk = mask.reshape(-1, patch_size, 1)
    m = m_prev

    i_tilde = h @ wi + z @ ri + bi
    f_tilde = h @ wf + z @ rf + bf
    o_tilde = h @ wo + z @ ro + bo
    z_tilde = h @ wz + z @ rz + bz

    m_t = jnp.maximum(f_tilde + m, i_tilde)
    i_t = jnp.exp(i_tilde - m_t)
    f_t = jnp.exp(f_tilde + m - m_t)
    o_t = jax.nn.sigmoid(o_tilde)
    n_t = f_t * n + i_t
    z_t = jnp.tanh(z_tilde)
    c_t = (c * f_t + z_t * i_t) * mk + (1 - mk) * c
    h_t = o_t * (c_t / (n_t + 1e-8)) * mk + (1 - mk) * h
    return c_t, m_t, h_t, n_t


if __name__ == "__main__":
    # Small, TPU-friendly shapes consistent with the module.
    B, P, D_MODEL, DFF = 2, 8, 32, 128

    key = jax.random.PRNGKey(0)
    kp, kz, kc, km, kh, kn, kmask = jax.random.split(key, 7)

    params = init_params(kp, D_MODEL, DFF)
    fused = fuse_params(params)

    z_input = jax.random.normal(kz, (B, P, D_MODEL), jnp.float32)
    c_prev = jax.random.normal(kc, (B, P, DFF), jnp.float32)
    m_prev = jax.random.normal(km, (B, P, DFF), jnp.float32)
    h_prev = jax.random.normal(kh, (B, P, DFF), jnp.float32)
    n_prev = jnp.abs(jax.random.normal(kn, (B, P, DFF), jnp.float32)) + 0.5
    mask = (jax.random.uniform(kmask, (B, P)) > 0.3).astype(jnp.float32)

    outs = custom_lstm_cell(
        z_input, c_prev, m_prev, h_prev, n_prev, mask, fused,
        patch_size=P, d_model=D_MODEL, dff=DFF)
    outs = jax.block_until_ready(outs)

    refs = reference_jax(z_input, c_prev, m_prev, h_prev, n_prev, mask, params,
                         P, D_MODEL, DFF)
    # Tolerance accounts for bf16 matmul operands, bf16 h_t output and the
    # approx reciprocal; the accumulator / epilogue stay f32.
    for o, r in zip(outs, refs):
        assert o.shape == r.shape, (o.shape, r.shape)
        err = float(jnp.max(jnp.abs(o.astype(jnp.float32) - r)))
        assert jnp.allclose(o.astype(jnp.float32), r, rtol=5e-2, atol=5e-2), err

    print("KERNEL_OK")
</pallas_src>

<mosaic_0001>
module attributes {stable_mosaic.version = 11 : i64} {
  func.func @_lstm_cell_kernel(%arg0: i32, %arg1: memref<16x128xf32, #tpu.memory_space<vmem>>, %arg2: memref<16x32xf32, #tpu.memory_space<vmem>>, %arg3: memref<16x128xf32, #tpu.memory_space<vmem>>, %arg4: memref<16x128xf32, #tpu.memory_space<vmem>>, %arg5: memref<16x128xf32, #tpu.memory_space<vmem>>, %arg6: memref<16x1xf32, #tpu.memory_space<vmem>>, %arg7: memref<128x512xbf16, #tpu.memory_space<vmem>>, %arg8: memref<32x512xbf16, #tpu.memory_space<vmem>>, %arg9: memref<1x512xf32, #tpu.memory_space<vmem>>, %arg10: memref<16x128xf32, #tpu.memory_space<vmem>>, %arg11: memref<16x128xf32, #tpu.memory_space<vmem>>, %arg12: memref<16x128xbf16, #tpu.memory_space<vmem>>, %arg13: memref<16x128xf32, #tpu.memory_space<vmem>>) attributes {dimension_semantics = [#tpu.dimension_semantics<parallel>], iteration_bounds = array<i64: 1>, scalar_prefetch = 0 : i64, scratch_operands = 0 : i64, tpu.core_type = #tpu.core_type<tc>, window_params = [{transform_indices = @transform_0, window_bounds = array<i64: 16, 128>}, {transform_indices = @transform_1, window_bounds = array<i64: 16, 32>}, {transform_indices = @transform_2, window_bounds = array<i64: 16, 128>}, {transform_indices = @transform_3, window_bounds = array<i64: 16, 128>}, {transform_indices = @transform_4, window_bounds = array<i64: 16, 128>}, {transform_indices = @transform_5, window_bounds = array<i64: 16, 1>}, {pipeline_mode = #tpu.pipeline_mode<synchronous>, transform_indices = @transform_6, window_bounds = array<i64: 128, 512>}, {pipeline_mode = #tpu.pipeline_mode<synchronous>, transform_indices = @transform_7, window_bounds = array<i64: 32, 512>}, {pipeline_mode = #tpu.pipeline_mode<synchronous>, transform_indices = @transform_8, window_bounds = array<i64: 1, 512>}, {transform_indices = @transform_9, window_bounds = array<i64: 16, 128>}, {transform_indices = @transform_10, window_bounds = array<i64: 16, 128>}, {transform_indices = @transform_11, window_bounds = array<i64: 16, 128>}, {transform_indices = @transform_12, window_bounds = array<i64: 16, 128>}]} {
    %c0 = arith.constant 0 : index
    %c0_0 = arith.constant 0 : index
    %0 = vector.load %arg1[%c0, %c0_0] : memref<16x128xf32, #tpu.memory_space<vmem>>, vector<16x128xf32>
    %1 = arith.truncf %0 : vector<16x128xf32> to vector<16x128xbf16>
    %c0_1 = arith.constant 0 : index
    %c0_2 = arith.constant 0 : index
    %2 = vector.load %arg2[%c0_1, %c0_2] : memref<16x32xf32, #tpu.memory_space<vmem>>, vector<16x32xf32>
    %3 = arith.truncf %2 : vector<16x32xf32> to vector<16x32xbf16>
    %c0_3 = arith.constant 0 : index
    %c0_4 = arith.constant 0 : index
    %4 = vector.load %arg7[%c0_3, %c0_4] : memref<128x512xbf16, #tpu.memory_space<vmem>>, vector<128x512xbf16>
    %cst = arith.constant dense<0.000000e+00> : vector<16x512xf32>
    %5 = tpu.matmul %1, %4, %cst {dimension_numbers = #tpu.dot_dimension_numbers<[1], [0], [0], [1], [0, 0, 1, 1], [], []>} : vector<16x128xbf16>, vector<128x512xbf16>, vector<16x512xf32> -> vector<16x512xf32>
    %c0_5 = arith.constant 0 : index
    %c0_6 = arith.constant 0 : index
    %6 = vector.load %arg8[%c0_5, %c0_6] : memref<32x512xbf16, #tpu.memory_space<vmem>>, vector<32x512xbf16>
    %cst_7 = arith.constant dense<0.000000e+00> : vector<16x512xf32>
    %7 = tpu.matmul %3, %6, %cst_7 {dimension_numbers = #tpu.dot_dimension_numbers<[1], [0], [0], [1], [0, 0, 1, 1], [], []>} : vector<16x32xbf16>, vector<32x512xbf16>, vector<16x512xf32> -> vector<16x512xf32>
    %8 = arith.addf %5, %7 : vector<16x512xf32>
    %c0_8 = arith.constant 0 : index
    %c0_9 = arith.constant 0 : index
    %9 = vector.load %arg9[%c0_8, %c0_9] : memref<1x512xf32, #tpu.memory_space<vmem>>, vector<1x512xf32>
    %10 = vector.broadcast %9 : vector<1x512xf32> to vector<16x512xf32>
    %11 = arith.addf %8, %10 : vector<16x512xf32>
    %12 = vector.extract_strided_slice %11 {offsets = [0, 0], sizes = [16, 128], strides = [1, 1]} : vector<16x512xf32> to vector<16x128xf32>
    %13 = vector.extract_strided_slice %11 {offsets = [0, 128], sizes = [16, 128], strides = [1, 1]} : vector<16x512xf32> to vector<16x128xf32>
    %14 = vector.extract_strided_slice %11 {offsets = [0, 256], sizes = [16, 128], strides = [1, 1]} : vector<16x512xf32> to vector<16x128xf32>
    %15 = vector.extract_strided_slice %11 {offsets = [0, 384], sizes = [16, 128], strides = [1, 1]} : vector<16x512xf32> to vector<16x128xf32>
    %c0_10 = arith.constant 0 : index
    %c0_11 = arith.constant 0 : index
    %16 = vector.load %arg4[%c0_10, %c0_11] : memref<16x128xf32, #tpu.memory_space<vmem>>, vector<16x128xf32>
    %c0_12 = arith.constant 0 : index
    %c0_13 = arith.constant 0 : index
    %17 = vector.load %arg3[%c0_12, %c0_13] : memref<16x128xf32, #tpu.memory_space<vmem>>, vector<16x128xf32>
    %c0_14 = arith.constant 0 : index
    %c0_15 = arith.constant 0 : index
    %18 = vector.load %arg5[%c0_14, %c0_15] : memref<16x128xf32, #tpu.memory_space<vmem>>, vector<16x128xf32>
    %c0_16 = arith.constant 0 : index
    %c0_17 = arith.constant 0 : index
    %19 = vector.load %arg6[%c0_16, %c0_17] : memref<16x1xf32, #tpu.memory_space<vmem>>, vector<16x1xf32>
    %cst_18 = arith.constant 0.000000e+00 : f32
    %20 = vector.broadcast %cst_18 : f32 to vector<16x1xf32>
    %21 = arith.cmpf ogt, %19, %20 : vector<16x1xf32>
    %22 = arith.addf %13, %16 : vector<16x128xf32>
    %23 = arith.maximumf %22, %12 : vector<16x128xf32>
    %24 = arith.subf %12, %23 : vector<16x128xf32>
    %25 = math.exp %24 : vector<16x128xf32>
    %26 = arith.addf %13, %16 : vector<16x128xf32>
    %27 = arith.subf %26, %23 : vector<16x128xf32>
    %28 = math.exp %27 : vector<16x128xf32>
    %29 = arith.negf %14 : vector<16x128xf32>
    %30 = math.exp %29 : vector<16x128xf32>
    %cst_19 = arith.constant 1.000000e+00 : f32
    %31 = vector.broadcast %cst_19 : f32 to vector<16x128xf32>
    %32 = arith.addf %31, %30 : vector<16x128xf32>
    %33 = arith.divf %31, %32 : vector<16x128xf32>
    %34 = arith.mulf %28, %18 : vector<16x128xf32>
    %35 = arith.addf %34, %25 : vector<16x128xf32>
    %36 = math.tanh %15 : vector<16x128xf32>
    %37 = arith.mulf %17, %28 : vector<16x128xf32>
    %38 = arith.mulf %36, %25 : vector<16x128xf32>
    %39 = arith.addf %37, %38 : vector<16x128xf32>
    %40 = vector.shape_cast %21 : vector<16x1xi1> to vector<16x1xi1>
    %41 = vector.broadcast %40 : vector<16x1xi1> to vector<16x128xi1>
    %42 = arith.select %41, %39, %17 : vector<16x128xi1>, vector<16x128xf32>
    %cst_20 = arith.constant 9.99999993E-9 : f32
    %43 = vector.broadcast %cst_20 : f32 to vector<16x128xf32>
    %44 = arith.addf %35, %43 : vector<16x128xf32>
    %45 = tpu.reciprocal %44 {approx = true} : vector<16x128xf32> -> vector<16x128xf32>
    %46 = arith.mulf %42, %45 : vector<16x128xf32>
    %47 = arith.mulf %33, %46 : vector<16x128xf32>
    %c0_21 = arith.constant 0 : index
    %c0_22 = arith.constant 0 : index
    %48 = vector.load %arg10[%c0_21, %c0_22] : memref<16x128xf32, #tpu.memory_space<vmem>>, vector<16x128xf32>
    tpu.vector_store %arg10[%c0_21, %c0_22], %42 {strides = array<i32>} : memref<16x128xf32, #tpu.memory_space<vmem>>, vector<16x128xf32>,
    %c0_23 = arith.constant 0 : index
    %c0_24 = arith.constant 0 : index
    %49 = vector.load %arg11[%c0_23, %c0_24] : memref<16x128xf32, #tpu.memory_space<vmem>>, vector<16x128xf32>
    tpu.vector_store %arg11[%c0_23, %c0_24], %23 {strides = array<i32>} : memref<16x128xf32, #tpu.memory_space<vmem>>, vector<16x128xf32>,
    %c0_25 = arith.constant 0 : index
    %c0_26 = arith.constant 0 : index
    %50 = vector.load %arg13[%c0_25, %c0_26] : memref<16x128xf32, #tpu.memory_space<vmem>>, vector<16x128xf32>
    tpu.vector_store %arg13[%c0_25, %c0_26], %35 {strides = array<i32>} : memref<16x128xf32, #tpu.memory_space<vmem>>, vector<16x128xf32>,
    %51 = arith.truncf %47 : vector<16x128xf32> to vector<16x128xbf16>
    %52 = vector.shape_cast %21 : vector<16x1xi1> to vector<16x1xi1>
    %53 = vector.broadcast %52 : vector<16x1xi1> to vector<16x128xi1>
    %54 = arith.select %53, %51, %1 : vector<16x128xi1>, vector<16x128xbf16>
    %c0_27 = arith.constant 0 : index
    %c0_28 = arith.constant 0 : index
    %55 = vector.load %arg12[%c0_27, %c0_28] : memref<16x128xbf16, #tpu.memory_space<vmem>>, vector<16x128xbf16>
    tpu.vector_store %arg12[%c0_27, %c0_28], %54 {strides = array<i32>} : memref<16x128xbf16, #tpu.memory_space<vmem>>, vector<16x128xbf16>,
    return
  }
  func.func @transform_0(%arg0: i32) -> (i32, i32) {
    %c0_i32 = arith.constant 0 : i32
    %c0_i32_0 = arith.constant 0 : i32
    return %arg0, %c0_i32 : i32, i32
  }
  func.func @transform_1(%arg0: i32) -> (i32, i32) {
    %c0_i32 = arith.constant 0 : i32
    %c0_i32_0 = arith.constant 0 : i32
    return %arg0, %c0_i32 : i32, i32
  }
  func.func @transform_2(%arg0: i32) -> (i32, i32) {
    %c0_i32 = arith.constant 0 : i32
    %c0_i32_0 = arith.constant 0 : i32
    return %arg0, %c0_i32 : i32, i32
  }
  func.func @transform_3(%arg0: i32) -> (i32, i32) {
    %c0_i32 = arith.constant 0 : i32
    %c0_i32_0 = arith.constant 0 : i32
    return %arg0, %c0_i32 : i32, i32
  }
  func.func @transform_4(%arg0: i32) -> (i32, i32) {
    %c0_i32 = arith.constant 0 : i32
    %c0_i32_0 = arith.constant 0 : i32
    return %arg0, %c0_i32 : i32, i32
  }
  func.func @transform_5(%arg0: i32) -> (i32, i32) {
    %c0_i32 = arith.constant 0 : i32
    %c0_i32_0 = arith.constant 0 : i32
    return %arg0, %c0_i32 : i32, i32
  }
  func.func @transform_6(%arg0: i32) -> (i32, i32) {
    %c0_i32 = arith.constant 0 : i32
    %c0_i32_0 = arith.constant 0 : i32
    %c0_i32_1 = arith.constant 0 : i32
    return %c0_i32, %c0_i32_0 : i32, i32
  }
  func.func @transform_7(%arg0: i32) -> (i32, i32) {
    %c0_i32 = arith.constant 0 : i32
    %c0_i32_0 = arith.constant 0 : i32
    %c0_i32_1 = arith.constant 0 : i32
    return %c0_i32, %c0_i32_0 : i32, i32
  }
  func.func @transform_8(%arg0: i32) -> (i32, i32) {
    %c0_i32 = arith.constant 0 : i32
    %c0_i32_0 = arith.constant 0 : i32
    %c0_i32_1 = arith.constant 0 : i32
    return %c0_i32, %c0_i32_0 : i32, i32
  }
  func.func @transform_9(%arg0: i32) -> (i32, i32) {
    %c0_i32 = arith.constant 0 : i32
    %c0_i32_0 = arith.constant 0 : i32
    return %arg0, %c0_i32 : i32, i32
  }
  func.func @transform_10(%arg0: i32) -> (i32, i32) {
    %c0_i32 = arith.constant 0 : i32
    %c0_i32_0 = arith.constant 0 : i32
    return %arg0, %c0_i32 : i32, i32
  }
  func.func @transform_11(%arg0: i32) -> (i32, i32) {
    %c0_i32 = arith.constant 0 : i32
    %c0_i32_0 = arith.constant 0 : i32
    return %arg0, %c0_i32 : i32, i32
  }
  func.func @transform_12(%arg0: i32) -> (i32, i32) {
    %c0_i32 = arith.constant 0 : i32
    %c0_i32_0 = arith.constant 0 : i32
    return %arg0, %c0_i32 : i32, i32
  }
}

</mosaic_0001>

<llo_original>
// kernel: custom_lstm_cell.1
$region0: #{custom_lstm_cell.1}
  #allocation0 [shape = 'u32[]', space=smem, size = 0x4, offset = 0x4, fixed_abs, tag = 'smem constant byte address 0x4 - core index']
  #allocation1 [shape = 'u32[72,128]{1,0:T(1,128)}', space=vmem, size = 0x9000, scoped, tag = 'internal scratch']
  %s0 = inlined_call_operand.vmem [shape: f32[16,128], index: 0, kind: input, shape index: {}]
  %s1 = inlined_call_operand.hbm [shape: f32[16,32], index: 1, kind: input, shape index: {}]
  %s2 = inlined_call_operand.hbm [shape: f32[16,128], index: 2, kind: input, shape index: {}]
  %s3 = inlined_call_operand.hbm [shape: f32[16,128], index: 3, kind: input, shape index: {}]
  %s4 = inlined_call_operand.hbm [shape: f32[16,128], index: 4, kind: input, shape index: {}]
  %s5 = inlined_call_operand.vmem [shape: f32[16,1], index: 5, kind: input, shape index: {}]
  %s6 = inlined_call_operand.hbm [shape: bf16[128,512], index: 6, kind: input, shape index: {}]
  %s7 = inlined_call_operand.hbm [shape: bf16[32,512], index: 7, kind: input, shape index: {}]
  %s8 = inlined_call_operand.vmem [shape: f32[1,512], index: 8, kind: input, shape index: {}]
  %s9 = inlined_call_operand.hbm [shape: f32[16,128], index: 9, kind: output, shape index: {0}]
  %s10 = inlined_call_operand.hbm [shape: f32[16,128], index: 10, kind: output, shape index: {1}]
  %s11 = inlined_call_operand.hbm [shape: bf16[16,128], index: 11, kind: output, shape index: {2}]
  %s12 = inlined_call_operand.hbm [shape: f32[16,128], index: 12, kind: output, shape index: {3}]
  %13 = xla_tuple %s9, %s10, %s11, %s12
  %s14 = sld [smem:[#allocation0]]
  $region94: #{custom_lstm_cell.1} parent=0
    _
  %s16 = ssub.s32 1, %s14
  %s17 = scalar_select 0, %s16, %s14
  $region1: #{custom_lstm_cell.1} parent=0
    #allocation2 [shape = 'u8[8192]{0}', space=vmem, size = 0x2000, scoped, tag = 'input window, operand 1, single buffered']
    #allocation3 [shape = 's32[1]{0}', space=sflag, size = 0x4, scoped, tag = 'scoped memory for custom_lstm_cell.1']
    #allocation4 [shape = 's32[1]{0}', space=sflag, size = 0x4, scoped, tag = 'scoped memory for custom_lstm_cell.1']
    #allocation5 [shape = 'u8[8192]{0}', space=vmem, size = 0x2000, scoped, tag = 'input window, operand 2, single buffered']
    #allocation6 [shape = 's32[1]{0}', space=sflag, size = 0x4, scoped, tag = 'scoped memory for custom_lstm_cell.1']
    #allocation7 [shape = 'u8[8192]{0}', space=vmem, size = 0x2000, scoped, tag = 'input window, operand 3, single buffered']
    #allocation8 [shape = 'u8[8192]{0}', space=vmem, size = 0x2000, scoped, tag = 'input window, operand 4, single buffered']
    #allocation9 [shape = 's32[1]{0}', space=sflag, size = 0x4, scoped, tag = 'scoped memory for custom_lstm_cell.1']
    #allocation10 [shape = 'u8[131072]{0}', space=vmem, size = 0x20000, scoped, tag = 'input window, operand 6, single buffered']
    #allocation11 [shape = 'u8[32768]{0}', space=vmem, size = 0x8000, scoped, tag = 'input window, operand 7, single buffered']
    #allocation12 [shape = 's32[1]{0}', space=sflag, size = 0x4, scoped, tag = 'scoped memory for custom_lstm_cell.1']
    #allocation13 [shape = 'u8[8192]{0}', space=vmem, size = 0x2000, scoped, tag = 'output window, operand 0, single buffered']
    #allocation14 [shape = 'u8[8192]{0}', space=vmem, size = 0x2000, scoped, tag = 'output window, operand 1, single buffered']
    #allocation15 [shape = 's32[1]{0}', space=sflag, size = 0x4, scoped, tag = 'scoped memory for custom_lstm_cell.1']
    #allocation16 [shape = 'u8[4096]{0}', space=vmem, size = 0x1000, scoped, tag = 'output window, operand 2, single buffered']
    #allocation17 [shape = 'u8[8192]{0}', space=vmem, size = 0x2000, scoped, tag = 'output window, operand 3, single buffered']
    #allocation18 [shape = 's32[1]{0}', space=sflag, size = 0x4, scoped, tag = 'scoped memory for custom_lstm_cell.1']
    %18 = vsyncpa [#allocation3], 0
    %19 = vsyncpa [#allocation6], 0
    %20 = vsyncpa [#allocation9], 0
    %21 = vsyncpa [#allocation12], 0
    %22 = vsyncpa [#allocation4], 0
    %23 = vsyncpa [#allocation15], 0
    %24 = vsyncpa [#allocation18], 0
    // Predicated region
    $region2: #{custom_lstm_cell.1} parent=1 // pred_check
      _
    $region3: #{custom_lstm_cell.1} parent=1 // pred_check_branch
      %26 = sbr.rel (0) target = $region5
    $region4: #{custom_lstm_cell.1} parent=1 // pred_region
      _
    $region5: #{custom_lstm_cell.1} parent=1 // pred_fallthru
      _
    // Predicated region
    $region6: #{custom_lstm_cell.1} parent=1 // pred_check
      _
    $region7: #{custom_lstm_cell.1} parent=1 // pred_check_branch
      %28 = sbr.rel (0) target = $region9
    $region8: #{custom_lstm_cell.1} parent=1 // pred_region
      %30 = vsyncadd [#allocation3], 0
      %s31 = sshll.u32 %s1, 4
      %s32 = int_to_ptr.hbm [resolvable:$true] %s31
      %s33 = sshll.u32 [#allocation2], 4
      %s34 = int_to_ptr.vmem [resolvable:$true] %s33
      %39 = dma.hbm_to_vmem [thread:$0]  %s32, 256, %s34, [#allocation3], 128, 128, 8
    $region9: #{custom_lstm_cell.1} parent=1 // pred_fallthru
      _
    // Predicated region
    $region10: #{custom_lstm_cell.1} parent=1 // pred_check
      _
    $region11: #{custom_lstm_cell.1} parent=1 // pred_check_branch
      %41 = sbr.rel (0) target = $region13
    $region12: #{custom_lstm_cell.1} parent=1 // pred_region
      %43 = vsyncadd [#allocation6], 0
      %s44 = sshll.u32 %s2, 4
      %s45 = int_to_ptr.hbm [resolvable:$true] %s44
      %s46 = sshll.u32 [#allocation5], 4
      %s47 = int_to_ptr.vmem [resolvable:$true] %s46
      %52 = dma.hbm_to_vmem [thread:$0]  %s45, 256, %s47, [#allocation6], 128, 128, 8
    $region13: #{custom_lstm_cell.1} parent=1 // pred_fallthru
      _
    // Predicated region
    $region14: #{custom_lstm_cell.1} parent=1 // pred_check
      _
    $region15: #{custom_lstm_cell.1} parent=1 // pred_check_branch
      %54 = sbr.rel (0) target = $region17
    $region16: #{custom_lstm_cell.1} parent=1 // pred_region
      %56 = vsyncadd [#allocation6], 0
      %s57 = sshll.u32 %s3, 4
      %s58 = int_to_ptr.hbm [resolvable:$true] %s57
      %s59 = sshll.u32 [#allocation7], 4
      %s60 = int_to_ptr.vmem [resolvable:$true] %s59
      %65 = dma.hbm_to_vmem [thread:$0]  %s58, 256, %s60, [#allocation6], 128, 128, 8
    $region17: #{custom_lstm_cell.1} parent=1 // pred_fallthru
      _
    // Predicated region
    $region18: #{custom_lstm_cell.1} parent=1 // pred_check
      _
    $region19: #{custom_lstm_cell.1} parent=1 // pred_check_branch
      %67 = sbr.rel (0) target = $region21
    $region20: #{custom_lstm_cell.1} parent=1 // pred_region
      %69 = vsyncadd [#allocation9], 0
      %s70 = sshll.u32 %s4, 4
      %s71 = int_to_ptr.hbm [resolvable:$true] %s70
      %s72 = sshll.u32 [#allocation8], 4
      %s73 = int_to_ptr.vmem [resolvable:$true] %s72
      %78 = dma.hbm_to_vmem [thread:$0]  %s71, 256, %s73, [#allocation9], 128, 128, 8
    $region21: #{custom_lstm_cell.1} parent=1 // pred_fallthru
      _
    // Predicated region
    $region22: #{custom_lstm_cell.1} parent=1 // pred_check
      _
    $region23: #{custom_lstm_cell.1} parent=1 // pred_check_branch
      %80 = sbr.rel (0) target = $region25
    $region24: #{custom_lstm_cell.1} parent=1 // pred_region
      _
    $region25: #{custom_lstm_cell.1} parent=1 // pred_fallthru
      _
    // Predicated region
    $region26: #{custom_lstm_cell.1} parent=1 // pred_check
      _
    $region27: #{custom_lstm_cell.1} parent=1 // pred_check_branch
      %82 = sbr.rel (0) target = $region29
    $region28: #{custom_lstm_cell.1} parent=1 // pred_region
      %84 = vsyncadd [#allocation9], 0
      %s85 = sshll.u32 %s6, 4
      %s86 = int_to_ptr.hbm [resolvable:$true] %s85
      %s87 = sshll.u32 [#allocation10], 4
      %s88 = int_to_ptr.vmem [resolvable:$true] %s87
      %93 = dma.hbm_to_vmem [thread:$0]  %s86, 4096, %s88, [#allocation9], 256, 256, 16
    $region29: #{custom_lstm_cell.1} parent=1 // pred_fallthru
      _
    // Predicated region
    $region30: #{custom_lstm_cell.1} parent=1 // pred_check
      _
    $region31: #{custom_lstm_cell.1} parent=1 // pred_check_branch
      %95 = sbr.rel (0) target = $region33
    $region32: #{custom_lstm_cell.1} parent=1 // pred_region
      %97 = vsyncadd [#allocation12], 0
      %s98 = sshll.u32 %s7, 4
      %s99 = int_to_ptr.hbm [resolvable:$true] %s98
      %s100 = sshll.u32 [#allocation11], 4
      %s101 = int_to_ptr.vmem [resolvable:$true] %s100
      %106 = dma.hbm_to_vmem [thread:$0]  %s99, 1024, %s101, [#allocation12], 256, 256, 16
    $region33: #{custom_lstm_cell.1} parent=1 // pred_fallthru
      _
    // Predicated region
    $region34: #{custom_lstm_cell.1} parent=1 // pred_check
      _
    $region35: #{custom_lstm_cell.1} parent=1 // pred_check_branch
      %108 = sbr.rel (0) target = $region37
    $region36: #{custom_lstm_cell.1} parent=1 // pred_region
      _
    $region37: #{custom_lstm_cell.1} parent=1 // pred_fallthru
      _
    // Predicated region
    $region38: #{custom_lstm_cell.1} parent=1 // pred_check
      _
    $region39: #{custom_lstm_cell.1} parent=1 // pred_check_branch
      %110 = sbr.rel (0) target = $region41
    $region40: #{custom_lstm_cell.1} parent=1 // pred_region
      %112 = dma.done [#allocation3], 256
    $region41: #{custom_lstm_cell.1} parent=1 // pred_fallthru
      _
    // Predicated region
    $region42: #{custom_lstm_cell.1} parent=1 // pred_check
      _
    $region43: #{custom_lstm_cell.1} parent=1 // pred_check_branch
      %114 = sbr.rel (0) target = $region45
    $region44: #{custom_lstm_cell.1} parent=1 // pred_region
      %116 = dma.done [#allocation6], 256
    $region45: #{custom_lstm_cell.1} parent=1 // pred_fallthru
      _
    // Predicated region
    $region46: #{custom_lstm_cell.1} parent=1 // pred_check
      _
    $region47: #{custom_lstm_cell.1} parent=1 // pred_check_branch
      %118 = sbr.rel (0) target = $region49
    $region48: #{custom_lstm_cell.1} parent=1 // pred_region
      %120 = dma.done [#allocation6], 256
    $region49: #{custom_lstm_cell.1} parent=1 // pred_fallthru
      _
    // Predicated region
    $region50: #{custom_lstm_cell.1} parent=1 // pred_check
      _
    $region51: #{custom_lstm_cell.1} parent=1 // pred_check_branch
      %122 = sbr.rel (0) target = $region53
    $region52: #{custom_lstm_cell.1} parent=1 // pred_region
      %124 = dma.done [#allocation9], 256
    $region53: #{custom_lstm_cell.1} parent=1 // pred_fallthru
      _
    // Predicated region
    $region54: #{custom_lstm_cell.1} parent=1 // pred_check
      _
    $region55: #{custom_lstm_cell.1} parent=1 // pred_check_branch
      %126 = sbr.rel (0) target = $region57
    $region56: #{custom_lstm_cell.1} parent=1 // pred_region
      %128 = dma.done [#allocation9], 4096
    $region57: #{custom_lstm_cell.1} parent=1 // pred_fallthru
      _
    // Predicated region
    $region58: #{custom_lstm_cell.1} parent=1 // pred_check
      _
    $region59: #{custom_lstm_cell.1} parent=1 // pred_check_branch
      %130 = sbr.rel (0) target = $region61
    $region60: #{custom_lstm_cell.1} parent=1 // pred_region
      %132 = dma.done [#allocation12], 1024
    $region61: #{custom_lstm_cell.1} parent=1 // pred_fallthru
      _
    %v134 = vld [vmem:[%s0] sm:$0xff]
    %v135 = vld [vmem:[%s0 + $0x8] sm:$0xff]
    %v136 = vpack.c.bf16 %v134, %v134
    %v137 = vpack.c.bf16 %v135, %v135
    %v138 = vld [vmem:[#allocation2] sm:$0xff]
    %v139 = vld [vmem:[#allocation2 + $0x8] sm:$0xff]
    %v140 = vpack.c.bf16 %v139, %v138
    %v141 = vld [vmem:[#allocation10] sm:$0xff]
    %v142 = vld [vmem:[#allocation10 + $0x8] sm:$0xff]
    %v143 = vld [vmem:[#allocation10 + $0x10] sm:$0xff]
    %v144 = vld [vmem:[#allocation10 + $0x18] sm:$0xff]
    %v145 = vld [vmem:[#allocation10 + $0x20] sm:$0xff]
    %v146 = vld [vmem:[#allocation10 + $0x28] sm:$0xff]
    %v147 = vld [vmem:[#allocation10 + $0x30] sm:$0xff]
    %v148 = vld [vmem:[#allocation10 + $0x38] sm:$0xff]
    %v149 = vld [vmem:[#allocation10 + $0x40] sm:$0xff]
    %v150 = vld [vmem:[#allocation10 + $0x48] sm:$0xff]
    %v151 = vld [vmem:[#allocation10 + $0x50] sm:$0xff]
    %v152 = vld [vmem:[#allocation10 + $0x58] sm:$0xff]
    %v153 = vld [vmem:[#allocation10 + $0x60] sm:$0xff]
    %v154 = vld [vmem:[#allocation10 + $0x68] sm:$0xff]
    %v155 = vld [vmem:[#allocation10 + $0x70] sm:$0xff]
    %v156 = vld [vmem:[#allocation10 + $0x78] sm:$0xff]
    %v157 = vld [vmem:[#allocation10 + $0x80] sm:$0xff]
    %v158 = vld [vmem:[#allocation10 + $0x88] sm:$0xff]
    %v159 = vld [vmem:[#allocation10 + $0x90] sm:$0xff]
    %v160 = vld [vmem:[#allocation10 + $0x98] sm:$0xff]
    %v161 = vld [vmem:[#allocation10 + $0xa0] sm:$0xff]
    %v162 = vld [vmem:[#allocation10 + $0xa8] sm:$0xff]
    %v163 = vld [vmem:[#allocation10 + $0xb0] sm:$0xff]
    %v164 = vld [vmem:[#allocation10 + $0xb8] sm:$0xff]
    %v165 = vld [vmem:[#allocation10 + $0xc0] sm:$0xff]
    %v166 = vld [vmem:[#allocation10 + $0xc8] sm:$0xff]
    %v167 = vld [vmem:[#allocation10 + $0xd0] sm:$0xff]
    %v168 = vld [vmem:[#allocation10 + $0xd8] sm:$0xff]
    %v169 = vld [vmem:[#allocation10 + $0xe0] sm:$0xff]
    %v170 = vld [vmem:[#allocation10 + $0xe8] sm:$0xff]
    %v171 = vld [vmem:[#allocation10 + $0xf0] sm:$0xff]
    %v172 = vld [vmem:[#allocation10 + $0xf8] sm:$0xff]
    %v173 = vld [vmem:[#allocation11] sm:$0xff]
    %v174 = vld [vmem:[#allocation11 + $0x8] sm:$0xff]
    %v175 = vld [vmem:[#allocation11 + $0x10] sm:$0xff]
    %v176 = vld [vmem:[#allocation11 + $0x18] sm:$0xff]
    %v177 = vld [vmem:[#allocation11 + $0x20] sm:$0xff]
    %v178 = vld [vmem:[#allocation11 + $0x28] sm:$0xff]
    %v179 = vld [vmem:[#allocation11 + $0x30] sm:$0xff]
    %v180 = vld [vmem:[#allocation11 + $0x38] sm:$0xff]
    %v189 = vunpack.c.l.b16 %v173
    %v190 = vunpack.c.h.b16 %v173
    %v191 = vunpack.c.l.b16 %v174
    %v192 = vunpack.c.h.b16 %v174
    %v193 = vunpack.c.l.b16 %v175
    %v194 = vunpack.c.h.b16 %v175
    %v195 = vunpack.c.l.b16 %v176
    %v196 = vunpack.c.h.b16 %v176
    %v197 = vunpack.c.l.b16 %v177
    %v198 = vunpack.c.h.b16 %v177
    %v199 = vunpack.c.l.b16 %v178
    %v200 = vunpack.c.h.b16 %v178
    %v201 = vunpack.c.l.b16 %v179
    %v202 = vunpack.c.h.b16 %v179
    %v203 = vunpack.c.l.b16 %v180
    %v204 = vunpack.c.h.b16 %v180
    %v205 = vpack.c.b16 %v193, %v189
    %v206 = vpack.c.b16 %v194, %v190
    %v207 = vpack.c.b16 %v195, %v191
    %v208 = vpack.c.b16 %v196, %v192
    %v209 = vpack.c.b16 %v201, %v197
    %v210 = vpack.c.b16 %v202, %v198
    %v211 = vpack.c.b16 %v203, %v199
    %v212 = vpack.c.b16 %v204, %v200
    %vm221 = vcmask 261120
    %v223 = vsel %vm221, %v140, 0
    %225 = vmatpush.bf16.msra.mxu0 0
    %226 = vmatpush.bf16.msra.mxu0 0
    %227 = vmatpush.bf16.msra.mxu0 0
    %228 = vmatpush.bf16.msra.mxu0 0
    %229 = vmatpush.bf16.msra.mxu0 0
    %230 = vmatpush.bf16.msra.mxu0 0
    %231 = vmatpush.bf16.msra.mxu0 %v209
    %232 = vmatpush.bf16.msra.mxu0 %v205
    %233 = vmatmul.bf16.gmra.mxu0 %v223
    %v234 = vpop.f32.mrf.mxu0
    %v235 = vadd.f32 0.0, %v234
    %v236 = vpop.f32.mrf.mxu0
    %v237 = vadd.f32 0.0, %v236
    %238 = vdwg.mxu0
    %239 = vmatpush.bf16.msra.mxu0 0
    %240 = vmatpush.bf16.msra.mxu0 0
    %241 = vmatpush.bf16.msra.mxu0 0
    %242 = vmatpush.bf16.msra.mxu0 0
    %243 = vmatpush.bf16.msra.mxu0 0
    %244 = vmatpush.bf16.msra.mxu0 0
    %245 = vmatpush.bf16.msra.mxu0 %v210
    %246 = vmatpush.bf16.msra.mxu0 %v206
    %247 = vmatmul.bf16.gmra.mxu0 %v223
    %v248 = vpop.f32.mrf.mxu0
    %v249 = vadd.f32 0.0, %v248
    %v250 = vpop.f32.mrf.mxu0
    %v251 = vadd.f32 0.0, %v250
    %252 = vdwg.mxu0
    %253 = vmatpush.bf16.msra.mxu0 0
    %254 = vmatpush.bf16.msra.mxu0 0
    %255 = vmatpush.bf16.msra.mxu0 0
    %256 = vmatpush.bf16.msra.mxu0 0
    %257 = vmatpush.bf16.msra.mxu0 0
    %258 = vmatpush.bf16.msra.mxu0 0
    %259 = vmatpush.bf16.msra.mxu0 %v211
    %260 = vmatpush.bf16.msra.mxu0 %v207
    %261 = vmatmul.bf16.gmra.mxu0 %v223
    %v262 = vpop.f32.mrf.mxu0
    %v263 = vadd.f32 0.0, %v262
    %v264 = vpop.f32.mrf.mxu0
    %v265 = vadd.f32 0.0, %v264
    %266 = vdwg.mxu0
    %267 = vmatpush.bf16.msra.mxu0 0
    %268 = vmatpush.bf16.msra.mxu0 0
    %269 = vmatpush.bf16.msra.mxu0 0
    %270 = vmatpush.bf16.msra.mxu0 0
    %271 = vmatpush.bf16.msra.mxu0 0
    %272 = vmatpush.bf16.msra.mxu0 0
    %273 = vmatpush.bf16.msra.mxu0 %v212
    %274 = vmatpush.bf16.msra.mxu0 %v208
    %275 = vmatmul.bf16.gmra.mxu0 %v223
    %v276 = vpop.f32.mrf.mxu0
    %v277 = vadd.f32 0.0, %v276
    %v278 = vpop.f32.mrf.mxu0
    %v279 = vadd.f32 0.0, %v278
    %280 = vdwg.mxu0
    %v283 = vunpack.c.l.b16 %v136
    %v284 = vunpack.c.l.b16 %v137
    %v285 = vpack.c.b16 %v284, %v283
    %v319 = vunpack.c.l.b16 %v141
    %v320 = vunpack.c.h.b16 %v141
    %v321 = vunpack.c.l.b16 %v142
    %v322 = vunpack.c.h.b16 %v142
    %v323 = vunpack.c.l.b16 %v143
    %v324 = vunpack.c.h.b16 %v143
    %v325 = vunpack.c.l.b16 %v144
    %v326 = vunpack.c.h.b16 %v144
    %v327 = vunpack.c.l.b16 %v145
    %v328 = vunpack.c.h.b16 %v145
    %v329 = vunpack.c.l.b16 %v146
    %v330 = vunpack.c.h.b16 %v146
    %v331 = vunpack.c.l.b16 %v147
    %v332 = vunpack.c.h.b16 %v147
    %v333 = vunpack.c.l.b16 %v148
    %v334 = vunpack.c.h.b16 %v148
    %v335 = vunpack.c.l.b16 %v149
    %v336 = vunpack.c.h.b16 %v149
    %v337 = vunpack.c.l.b16 %v150
    %v338 = vunpack.c.h.b16 %v150
    %v339 = vunpack.c.l.b16 %v151
    %v340 = vunpack.c.h.b16 %v151
    %v341 = vunpack.c.l.b16 %v152
    %v342 = vunpack.c.h.b16 %v152
    %v343 = vunpack.c.l.b16 %v153
    %v344 = vunpack.c.h.b16 %v153
    %v345 = vunpack.c.l.b16 %v154
    %v346 = vunpack.c.h.b16 %v154
    %v347 = vunpack.c.l.b16 %v155
    %v348 = vunpack.c.h.b16 %v155
    %v349 = vunpack.c.l.b16 %v156
    %v350 = vunpack.c.h.b16 %v156
    %v351 = vunpack.c.l.b16 %v157
    %v352 = vunpack.c.h.b16 %v157
    %v353 = vunpack.c.l.b16 %v158
    %v354 = vunpack.c.h.b16 %v158
    %v355 = vunpack.c.l.b16 %v159
    %v356 = vunpack.c.h.b16 %v159
    %v357 = vunpack.c.l.b16 %v160
    %v358 = vunpack.c.h.b16 %v160
    %v359 = vunpack.c.l.b16 %v161
    %v360 = vunpack.c.h.b16 %v161
    %v361 = vunpack.c.l.b16 %v162
    %v362 = vunpack.c.h.b16 %v162
    %v363 = vunpack.c.l.b16 %v163
    %v364 = vunpack.c.h.b16 %v163
    %v365 = vunpack.c.l.b16 %v164
    %v366 = vunpack.c.h.b16 %v164
    %v367 = vunpack.c.l.b16 %v165
    %v368 = vunpack.c.h.b16 %v165
    %v369 = vunpack.c.l.b16 %v166
    %v370 = vunpack.c.h.b16 %v166
    %v371 = vunpack.c.l.b16 %v167
    %v372 = vunpack.c.h.b16 %v167
    %v373 = vunpack.c.l.b16 %v168
    %v374 = vunpack.c.h.b16 %v168
    %v375 = vunpack.c.l.b16 %v169
    %v376 = vunpack.c.h.b16 %v169
    %v377 = vunpack.c.l.b16 %v170
    %v378 = vunpack.c.h.b16 %v170
    %v379 = vunpack.c.l.b16 %v171
    %v380 = vunpack.c.h.b16 %v171
    %v381 = vunpack.c.l.b16 %v172
    %v382 = vunpack.c.h.b16 %v172
    %v383 = vpack.c.b16 %v323, %v319
    %v384 = vpack.c.b16 %v324, %v320
    %v385 = vpack.c.b16 %v325, %v321
    %v386 = vpack.c.b16 %v326, %v322
    %v387 = vpack.c.b16 %v331, %v327
    %v388 = vpack.c.b16 %v332, %v328
    %v389 = vpack.c.b16 %v333, %v329
    %v390 = vpack.c.b16 %v334, %v330
    %v391 = vpack.c.b16 %v339, %v335
    %v392 = vpack.c.b16 %v340, %v336
    %v393 = vpack.c.b16 %v341, %v337
    %v394 = vpack.c.b16 %v342, %v338
    %v395 = vpack.c.b16 %v347, %v343
    %v396 = vpack.c.b16 %v348, %v344
    %v397 = vpack.c.b16 %v349, %v345
    %v398 = vpack.c.b16 %v350, %v346
    %v399 = vpack.c.b16 %v355, %v351
    %v400 = vpack.c.b16 %v356, %v352
    %v401 = vpack.c.b16 %v357, %v353
    %v402 = vpack.c.b16 %v358, %v354
    %v403 = vpack.c.b16 %v363, %v359
    %v404 = vpack.c.b16 %v364, %v360
    %v405 = vpack.c.b16 %v365, %v361
    %v406 = vpack.c.b16 %v366, %v362
    %v407 = vpack.c.b16 %v371, %v367
    %v408 = vpack.c.b16 %v372, %v368
    %v409 = vpack.c.b16 %v373, %v369
    %v410 = vpack.c.b16 %v374, %v370
    %v411 = vpack.c.b16 %v379, %v375
    %v412 = vpack.c.b16 %v380, %v376
    %v413 = vpack.c.b16 %v381, %v377
    %v414 = vpack.c.b16 %v382, %v378
    %447 = vmatpush.bf16.msra.mxu0 %v411
    %448 = vmatpush.bf16.msra.mxu0 %v407
    %449 = vmatpush.bf16.msra.mxu0 %v403
    %450 = vmatpush.bf16.msra.mxu0 %v399
    %451 = vmatpush.bf16.msra.mxu0 %v395
    %452 = vmatpush.bf16.msra.mxu0 %v391
    %453 = vmatpush.bf16.msra.mxu0 %v387
    %454 = vmatpush.bf16.msra.mxu0 %v383
    %455 = vmatmul.bf16.gmra.mxu0 %v285
    %v456 = vpop.f32.mrf.mxu0
    %v457 = vadd.f32 %v235, %v456
    %v458 = vpop.f32.mrf.mxu0
    %v459 = vadd.f32 %v237, %v458
    %460 = vdwg.mxu0
    %461 = vmatpush.bf16.msra.mxu0 %v412
    %462 = vmatpush.bf16.msra.mxu0 %v408
    %463 = vmatpush.bf16.msra.mxu0 %v404
    %464 = vmatpush.bf16.msra.mxu0 %v400
    %465 = vmatpush.bf16.msra.mxu0 %v396
    %466 = vmatpush.bf16.msra.mxu0 %v392
    %467 = vmatpush.bf16.msra.mxu0 %v388
    %468 = vmatpush.bf16.msra.mxu0 %v384
    %469 = vmatmul.bf16.gmra.mxu0 %v285
    %v470 = vpop.f32.mrf.mxu0
    %v471 = vadd.f32 %v249, %v470
    %v472 = vpop.f32.mrf.mxu0
    %v473 = vadd.f32 %v251, %v472
    %474 = vdwg.mxu0
    %475 = vmatpush.bf16.msra.mxu0 %v413
    %476 = vmatpush.bf16.msra.mxu0 %v409
    %477 = vmatpush.bf16.msra.mxu0 %v405
    %478 = vmatpush.bf16.msra.mxu0 %v401
    %479 = vmatpush.bf16.msra.mxu0 %v397
    %480 = vmatpush.bf16.msra.mxu0 %v393
    %481 = vmatpush.bf16.msra.mxu0 %v389
    %482 = vmatpush.bf16.msra.mxu0 %v385
    %483 = vmatmul.bf16.gmra.mxu0 %v285
    %v484 = vpop.f32.mrf.mxu0
    %v485 = vadd.f32 %v263, %v484
    %v486 = vpop.f32.mrf.mxu0
    %v487 = vadd.f32 %v265, %v486
    %488 = vdwg.mxu0
    %489 = vmatpush.bf16.msra.mxu0 %v414
    %490 = vmatpush.bf16.msra.mxu0 %v410
    %491 = vmatpush.bf16.msra.mxu0 %v406
    %492 = vmatpush.bf16.msra.mxu0 %v402
    %493 = vmatpush.bf16.msra.mxu0 %v398
    %494 = vmatpush.bf16.msra.mxu0 %v394
    %495 = vmatpush.bf16.msra.mxu0 %v390
    %496 = vmatpush.bf16.msra.mxu0 %v386
    %497 = vmatmul.bf16.gmra.mxu0 %v285
    %v498 = vpop.f32.mrf.mxu0
    %v499 = vadd.f32 %v277, %v498
    %v500 = vpop.f32.mrf.mxu0
    %v501 = vadd.f32 %v279, %v500
    %502 = vdwg.mxu0
    %v503 = vld [vmem:[%s8] sm:$0xf]
    %v505 = vperm.slane %v503, 0
    %v506 = vperm.slane %v503, 1
    %v507 = vperm.slane %v503, 2
    %v508 = vperm.slane %v503, 3
    %v513 = vadd.f32 %v457, %v505
    %v514 = vadd.f32 %v471, %v506
    %v515 = vadd.f32 %v485, %v507
    %v516 = vadd.f32 %v499, %v508
    %v517 = vadd.f32 %v459, %v505
    %v518 = vadd.f32 %v473, %v506
    %v519 = vadd.f32 %v487, %v507
    %v520 = vadd.f32 %v501, %v508
    %v521 = vld [vmem:[#allocation7] sm:$0xff]
    %v522 = vld [vmem:[#allocation7 + $0x8] sm:$0xff]
    %v523 = vld [vmem:[#allocation5] sm:$0xff]
    %v524 = vld [vmem:[#allocation5 + $0x8] sm:$0xff]
    %v525 = vld [vmem:[#allocation8] sm:$0xff]
    %v526 = vld [vmem:[#allocation8 + $0x8] sm:$0xff]
    %v527 = vld [vmem:[%s5] sm:$0xff]
    %v528 = vld [vmem:[%s5 + $0x8] sm:$0xff]
    %vm529 = vcmp.gt.f32.partialorder %v527, 0.0
    %vm530 = vcmp.gt.f32.partialorder %v528, 0.0
    %v531 = vadd.f32 %v514, %v521
    %v532 = vadd.f32 %v518, %v522
    %v533 = vmax.f32 %v531, %v513
    %v534 = vmax.f32 %v532, %v517
    %v535 = vsub.f32 %v513, %v533
    %v536 = vsub.f32 %v517, %v534
    %v537 = vmul.f32 %v535, 1.442695
    %v538 = vpow.pop %v537
    %v539 = vmul.f32 %v536, 1.442695
    %v540 = vpow.pop %v539
    %v541 = vsub.f32 %v531, %v533
    %v542 = vsub.f32 %v532, %v534
    %v543 = vmul.f32 %v541, 1.442695
    %v544 = vpow.pop %v543
    %v545 = vmul.f32 %v542, 1.442695
    %v546 = vpow.pop %v545
    %v547 = vxor.u32 %v515, 2147483648
    %v548 = vxor.u32 %v519, 2147483648
    %v549 = vmul.f32 %v547, 1.442695
    %v550 = vpow.pop %v549
    %v551 = vmul.f32 %v548, 1.442695
    %v552 = vpow.pop %v551
    %v553 = vadd.f32 %v550, 1.0
    %v554 = vadd.f32 %v552, 1.0
    %v555 = vrcp.pop %v553
    %v556 = vmul.f32 %v553, %v555
    %v557 = vsub.f32 1.0, %v556
    %v558 = vmul.f32 %v555, %v557
    %v559 = vadd.f32 %v555, %v558
    %vm560 = vweird.f32 %v553
    %vm561 = vweird.f32 %v555
    %vm562 = vmor %vm560, %vm561
    %v563 = vsel %vm562, %v555, %v559
    %v564 = vand.u32 2147483647, %v553
    %vm565 = vcmp.eq.f32.partialorder %v564, 8.507059e+37
    %v566 = vand.u32 %v553, 2147483648
    %v567 = vor.u32 1.1754944e-38, %v566
    %v568 = vsel %vm565, %v567, %v563
    %v569 = vmul.f32 1.0, %v568
    %v570 = vrcp.pop %v554
    %v571 = vmul.f32 %v554, %v570
    %v572 = vsub.f32 1.0, %v571
    %v573 = vmul.f32 %v570, %v572
    %v574 = vadd.f32 %v570, %v573
    %vm575 = vweird.f32 %v554
    %vm576 = vweird.f32 %v570
    %vm577 = vmor %vm575, %vm576
    %v578 = vsel %vm577, %v570, %v574
    %v579 = vand.u32 2147483647, %v554
    %vm580 = vcmp.eq.f32.partialorder %v579, 8.507059e+37
    %v581 = vand.u32 %v554, 2147483648
    %v582 = vor.u32 1.1754944e-38, %v581
    %v583 = vsel %vm580, %v582, %v578
    %v584 = vmul.f32 1.0, %v583
    %v585 = vmul.f32 %v544, %v525
    %v586 = vmul.f32 %v546, %v526
    %v587 = vadd.f32 %v585, %v538
    %v588 = vadd.f32 %v586, %v540
    %v589 = vtanh.pop %v516
    %v590 = vtanh.pop %v520
    %v591 = vmul.f32 %v523, %v544
    %v592 = vmul.f32 %v524, %v546
    %v593 = vmul.f32 %v589, %v538
    %v594 = vmul.f32 %v590, %v540
    %v595 = vadd.f32 %v591, %v593
    %v596 = vadd.f32 %v592, %v594
    %v597 = vsel %vm529, 1, 0
    %v598 = vsel %vm530, 1, 0
    %599 = vset.pattern.permute.xlu0 0
    %600 = vperm.xlu0 %599, %v597
    %v601 = vpop.permute.xlu0 %600
    %602 = vset.pattern.permute.xlu0 0
    %603 = vperm.xlu0 %602, %v598
    %v604 = vpop.permute.xlu0 %603
    %vm605 = vcmp.eq.s32.totalorder %v601, 1
    %vm606 = vcmp.eq.s32.totalorder %v604, 1
    %v607 = vsel %vm605, %v595, %v523
    %v608 = vsel %vm606, %v596, %v524
    %v609 = vadd.f32 %v587, 1e-08
    %v610 = vadd.f32 %v588, 1e-08
    %v611 = vrcp.pop %v609
    %v612 = vrcp.pop %v610
    %v613 = vmul.f32 %v607, %v611
    %v614 = vmul.f32 %v608, %v612
    %v615 = vmul.f32 %v569, %v613
    %v616 = vmul.f32 %v584, %v614
    %617 = vst [vmem:[#allocation13] sm:$0xff] %v607
    %618 = vst [vmem:[#allocation13 + $0x8] sm:$0xff] %v608
    %619 = vst [vmem:[#allocation14] sm:$0xff] %v533
    %620 = vst [vmem:[#allocation14 + $0x8] sm:$0xff] %v534
    %621 = vst [vmem:[#allocation17] sm:$0xff] %v587
    %622 = vst [vmem:[#allocation17 + $0x8] sm:$0xff] %v588
    %v623 = vpack.c.bf16 %v615, %v615
    %v624 = vpack.c.bf16 %v616, %v616
    %vm625 = vmpackc.low %vm605, %vm605
    %vm626 = vmpackc.low %vm606, %vm606
    %v627 = vsel %vm625, %v623, %v136
    %v628 = vsel %vm626, %v624, %v137
    %629 = vst [vmem:[#allocation16] sm:$0xf] %v627
    %630 = vst [vmem:[#allocation16 + $0x4] sm:$0xf] %v628
    // Predicated region
    $region62: #{custom_lstm_cell.1} parent=1 // pred_check
      _
    $region63: #{custom_lstm_cell.1} parent=1 // pred_check_branch
      %632 = sbr.rel (0) target = $region65
    $region64: #{custom_lstm_cell.1} parent=1 // pred_region
      %634 = vsyncadd [#allocation4], 0
      %s635 = sshll.u32 [#allocation13], 4
      %s636 = int_to_ptr.vmem [resolvable:$true] %s635
      %s637 = sshll.u32 %s9, 4
      %s638 = int_to_ptr.hbm [resolvable:$true] %s637
      %643 = dma.vmem_to_hbm [thread:$0]  %s636, 256, %s638, [#allocation4], 128, 128, 8
    $region65: #{custom_lstm_cell.1} parent=1 // pred_fallthru
      _
    // Predicated region
    $region66: #{custom_lstm_cell.1} parent=1 // pred_check
      _
    $region67: #{custom_lstm_cell.1} parent=1 // pred_check_branch
      %645 = sbr.rel (0) target = $region69
    $region68: #{custom_lstm_cell.1} parent=1 // pred_region
      %647 = vsyncadd [#allocation15], 0
      %s648 = sshll.u32 [#allocation14], 4
      %s649 = int_to_ptr.vmem [resolvable:$true] %s648
      %s650 = sshll.u32 %s10, 4
      %s651 = int_to_ptr.hbm [resolvable:$true] %s650
      %656 = dma.vmem_to_hbm [thread:$0]  %s649, 256, %s651, [#allocation15], 128, 128, 8
    $region69: #{custom_lstm_cell.1} parent=1 // pred_fallthru
      _
    // Predicated region
    $region70: #{custom_lstm_cell.1} parent=1 // pred_check
      _
    $region71: #{custom_lstm_cell.1} parent=1 // pred_check_branch
      %658 = sbr.rel (0) target = $region73
    $region72: #{custom_lstm_cell.1} parent=1 // pred_region
      %660 = vsyncadd [#allocation15], 0
      %s661 = sshll.u32 [#allocation16], 4
      %s662 = int_to_ptr.vmem [resolvable:$true] %s661
      %s663 = sshll.u32 %s11, 4
      %s664 = int_to_ptr.hbm [resolvable:$true] %s663
      %669 = dma.vmem_to_hbm [thread:$0]  %s662, 128, %s664, [#allocation15], 64, 64, 4
    $region73: #{custom_lstm_cell.1} parent=1 // pred_fallthru
      _
    // Predicated region
    $region74: #{custom_lstm_cell.1} parent=1 // pred_check
      _
    $region75: #{custom_lstm_cell.1} parent=1 // pred_check_branch
      %671 = sbr.rel (0) target = $region77
    $region76: #{custom_lstm_cell.1} parent=1 // pred_region
      %673 = vsyncadd [#allocation18], 0
      %s674 = sshll.u32 [#allocation17], 4
      %s675 = int_to_ptr.vmem [resolvable:$true] %s674
      %s676 = sshll.u32 %s12, 4
      %s677 = int_to_ptr.hbm [resolvable:$true] %s676
      %682 = dma.vmem_to_hbm [thread:$0]  %s675, 256, %s677, [#allocation18], 128, 128, 8
    $region77: #{custom_lstm_cell.1} parent=1 // pred_fallthru
      _
    // Predicated region
    $region78: #{custom_lstm_cell.1} parent=1 // pred_check
      _
    $region79: #{custom_lstm_cell.1} parent=1 // pred_check_branch
      %684 = sbr.rel (0) target = $region81
    $region80: #{custom_lstm_cell.1} parent=1 // pred_region
      %686 = dma.done [#allocation4], 256
    $region81: #{custom_lstm_cell.1} parent=1 // pred_fallthru
      _
    // Predicated region
    $region82: #{custom_lstm_cell.1} parent=1 // pred_check
      _
    $region83: #{custom_lstm_cell.1} parent=1 // pred_check_branch
      %688 = sbr.rel (0) target = $region85
    $region84: #{custom_lstm_cell.1} parent=1 // pred_region
      %690 = dma.done [#allocation15], 256
    $region85: #{custom_lstm_cell.1} parent=1 // pred_fallthru
      _
    // Predicated region
    $region86: #{custom_lstm_cell.1} parent=1 // pred_check
      _
    $region87: #{custom_lstm_cell.1} parent=1 // pred_check_branch
      %692 = sbr.rel (0) target = $region89
    $region88: #{custom_lstm_cell.1} parent=1 // pred_region
      %694 = dma.done [#allocation15], 128
    $region89: #{custom_lstm_cell.1} parent=1 // pred_fallthru
      _
    // Predicated region
    $region90: #{custom_lstm_cell.1} parent=1 // pred_check
      _
    $region91: #{custom_lstm_cell.1} parent=1 // pred_check_branch
      %696 = sbr.rel (0) target = $region93
    $region92: #{custom_lstm_cell.1} parent=1 // pred_region
      %698 = dma.done [#allocation18], 256
    $region93: #{custom_lstm_cell.1} parent=1 // pred_fallthru
      _
    %699 = vsyncpa [#allocation3], 1
    %700 = vsyncpa [#allocation6], 1
    %701 = vsyncpa [#allocation9], 1
    %702 = vsyncpa [#allocation12], 1
    %703 = vsyncpa [#allocation4], 1
    %704 = vsyncpa [#allocation15], 1
    %705 = vsyncpa [#allocation18], 1

</llo_original>
